<compile_context>
chip_gen: v5e
topology: v5e:2x2
jax: 0.10.0
libtpu: 0.0.40
codegen_flags: <defaults>
</compile_context>

<pallas_src>
import jax
import jax.numpy as jnp
from jax.experimental import pallas as pl
from jax.experimental.pallas import tpu as pltpu


_TARGET_BLOCK_BYTES = 6 * 1024 * 1024     # per output block (x2 double-buffered = 12 MiB)
_MAX_COL_ELEMS = 64 * 1024                # max flattened-lane chunk per block (256 KiB/row)
_COL_STRIP = 2048                         # f32 elems per in-kernel strip ((8,2048) f32 = 16 vregs)
_VMEM_LIMIT_BYTES = 32 * 1024 * 1024      # fits v5e/v6e/v7x scoped limits
_DEFAULT_MIN_PALLAS_BYTES = 1 * 1024 * 1024


def _round_up(x: int, m: int) -> int:
    return ((x + m - 1) // m) * m


def _choose_tiling(bs: int, flat_w: int):
    """Pick (rows, col_chunk) blocks for the flattened (bs, flat_w) f32 output.

    Legality: rows is a multiple of 8 or equals bs; col_chunk is a multiple of
    128 (caller guarantees flat_w % 128 == 0).
    """
    # --- column chunk: <= _MAX_COL_ELEMS, near-even split of flat_w ---
    n_col = pl.cdiv(flat_w, _MAX_COL_ELEMS)
    col_chunk = min(flat_w, _round_up(pl.cdiv(flat_w, n_col), 128))
    n_col = pl.cdiv(flat_w, col_chunk)

    # --- rows: fill ~_TARGET_BLOCK_BYTES at this column width ---
    rows = max(1, _TARGET_BLOCK_BYTES // (col_chunk * 4))
    rows = min(rows, bs)
    if rows != bs:
        rows = max(8, (rows // 8) * 8)          # legal sublane count
        if rows >= bs:
            rows = bs

    # --- v7x megacore: guarantee >= 2 grid steps when the batch is big enough ---
    if rows == bs and bs >= 16 and n_col == 1:
        half = _round_up((bs + 1) // 2, 8)
        if half < bs:
            rows = half

    # --- prefer a near-even row split so only the true tail block is partial ---
    if rows != bs and rows % 8 == 0:
        n_row = pl.cdiv(bs, rows)
        rows = min(rows, max(8, _round_up(pl.cdiv(bs, n_row), 8)))

    return rows, col_chunk


def _broadcast_kernel(img_ref, o_ref):
    # img_ref: (1, col_chunk) chunk of the flattened img_emb (native dtype)
    # o_ref:   (rows, col_chunk) f32 output block; every row == the img chunk
    rows, cols = o_ref.shape                      # static Python ints
    n_groups, row_tail = divmod(rows, 8)

    # Walk small column strips so the broadcast value is never materialised at
    # block size (bounds vreg pressure to ~16-20 regs, no spills).
    for c0 in range(0, cols, _COL_STRIP):
        w = min(_COL_STRIP, cols - c0)
        src = img_ref[:, c0:c0 + w].astype(jnp.float32)     # (1, w): <= 2 vregs
        blk8 = jnp.broadcast_to(src, (8, w))                 # sublane replicate

        if n_groups == 1:
            o_ref[pl.ds(0, 8), c0:c0 + w] = blk8
        elif n_groups > 1:
            def body(g, carry, blk8=blk8, c0=c0, w=w):
                start = pl.multiple_of(g * 8, 8)             # tile-aligned offset
                o_ref[pl.ds(start, 8), c0:c0 + w] = blk8
                return carry
            jax.lax.fori_loop(0, n_groups, body, 0,
                              unroll=True if n_groups <= 8 else 4)
        if row_tail:
            o_ref[pl.ds(n_groups * 8, row_tail), c0:c0 + w] = blk8[:row_tail]


def _broadcast_pallas(img_emb, bs: int, d: int):
    flat_w = bs * d
    rows, col_chunk = _choose_tiling(bs, flat_w)
    n_row = pl.cdiv(bs, rows)
    n_col = pl.cdiv(flat_w, col_chunk)

    img_flat = img_emb.reshape(1, flat_w)

    out2d = pl.pallas_call(
        _broadcast_kernel,
        out_shape=jax.ShapeDtypeStruct((bs, flat_w), jnp.float32),
        grid_spec=pltpu.PrefetchScalarGridSpec(
            num_scalar_prefetch=0,
            # Column axis outermost: the tiny input chunk's block index is
            # constant across all inner row steps, so it is fetched once per
            # column chunk instead of once per grid step.
            grid=(n_col, n_row),
            in_specs=[pl.BlockSpec((1, col_chunk), lambda j, i: (0, j))],
            # Lane-dense ~6 MiB output blocks; rows mult-of-8 (or == bs),
            # col_chunk mult-of-128 -> always layout-legal, unmasked stores.
            out_specs=pl.BlockSpec((rows, col_chunk), lambda j, i: (i, j)),
            # NOTE: out pipeline depth left at the default (2); Buffered(3) is
            # a per-chip tunable (v6e) but costs an extra block of VMEM.
        ),
        compiler_params=pltpu.CompilerParams(
            dimension_semantics=("parallel", "parallel"),
            vmem_limit_bytes=_VMEM_LIMIT_BYTES,
        ),
    )(img_flat)
    return out2d.reshape(bs, bs, d)


class SimpleModelImageOnlyPallas:
    """Pallas TPU implementation of SimpleModelImageOnly.forward.

    Note: cell_id must be a static Python int (it selects the branch at trace
    time), exactly like the PyTorch reference's Python-level `if`.
    """

    def __init__(self, batch_size: int, embed_dim: int,
                 min_pallas_bytes: int = _DEFAULT_MIN_PALLAS_BYTES):
        self.bs = batch_size
        self.embed_dim = embed_dim
        self.min_pallas_bytes = min_pallas_bytes
        # Module has no learned parameters (deterministic by construction).

    def __call__(self, img_emb, text_emb, cell_id: int):
        bs, d = self.bs, self.embed_dim
        assert img_emb.shape == (bs, d)

        if cell_id != 0 and cell_id != 3:
            flat_w = bs * d
            out_bytes = bs * flat_w * 4
            if out_bytes >= self.min_pallas_bytes and flat_w % 128 == 0:
                return _broadcast_pallas(img_emb, bs, d)
            # Tiny output, or flattened width not 128-aligned: XLA's fused
            # broadcast is already at the HBM-store roofline — use it.
            return jnp.broadcast_to(
                img_emb.astype(jnp.float32)[None, :, :], (bs, bs, d))
        else:
            # Pass-through: return the input as-is (no copy, no kernel).
            # TODO(synk): the reference's .cuda() device move has no TPU analogue.
            return img_emb


if __name__ == "__main__":
    key = jax.random.PRNGKey(0)
    k_img, k_txt = jax.random.split(key)

    # --- Case A: canonical small shape (bs=8, embed_dim=128) ---
    bs, d = 8, 128
    img = jax.random.normal(k_img, (bs, d), dtype=jnp.float32)
    txt = jax.random.normal(k_txt, (bs, d), dtype=jnp.float32)
    # Force the Pallas path even at this small size so the kernel runs.
    model = SimpleModelImageOnlyPallas(bs, d, min_pallas_bytes=0)

    # Branch 1: cell_id not in {0,3} -> broadcast to (bs, bs, embed_dim), f32.
    out = jax.block_until_ready(model(img, txt, cell_id=1))
    ref = jnp.broadcast_to(img[None, :, :], (bs, bs, d))
    assert out.shape == (bs, bs, d)
    assert out.dtype == jnp.float32
    assert jnp.allclose(out, ref)

    # Branch 1 with bf16 input: f32 cast happens inside the kernel.
    img_bf16 = img.astype(jnp.bfloat16)
    out_bf16 = jax.block_until_ready(model(img_bf16, txt, cell_id=2))
    ref_bf16 = jnp.broadcast_to(
        img_bf16.astype(jnp.float32)[None, :, :], (bs, bs, d))
    assert out_bf16.dtype == jnp.float32
    assert jnp.allclose(out_bf16, ref_bf16)

    # Branch 2: cell_id in {0,3} -> identity (input returned directly).
    out_id = jax.block_until_ready(model(img, txt, cell_id=0))
    assert out_id.shape == (bs, d)
    assert out_id.dtype == img.dtype
    assert jnp.allclose(out_id, img)

    # --- Case B: bs not a multiple of the row block -> multi-step grid with a
    #     partial tail block (exercises fori_loop row-groups + masked tails). ---
    bs2, d2 = 20, 256
    img2 = jax.random.normal(k_img, (bs2, d2), dtype=jnp.float32)
    txt2 = jax.random.normal(k_txt, (bs2, d2), dtype=jnp.float32)
    model2 = SimpleModelImageOnlyPallas(bs2, d2, min_pallas_bytes=0)
    out2 = jax.block_until_ready(model2(img2, txt2, cell_id=5))
    ref2 = jnp.broadcast_to(img2[None, :, :], (bs2, bs2, d2))
    assert out2.shape == (bs2, bs2, d2)
    assert jnp.allclose(out2, ref2)

    print("KERNEL_OK")
</pallas_src>

<mosaic_0001>
module attributes {stable_mosaic.version = 11 : i64} {
  func.func @_broadcast_kernel(%arg0: i32, %arg1: i32, %arg2: memref<1x1024xf32, #tpu.memory_space<vmem>>, %arg3: memref<8x1024xf32, #tpu.memory_space<vmem>>) attributes {dimension_semantics = [#tpu.dimension_semantics<parallel>, #tpu.dimension_semantics<parallel>], iteration_bounds = array<i64: 1, 1>, scalar_prefetch = 0 : i64, scratch_operands = 0 : i64, tpu.core_type = #tpu.core_type<tc>, window_params = [{transform_indices = @transform_0, window_bounds = array<i64: 1, 1024>}, {transform_indices = @transform_1, window_bounds = array<i64: 8, 1024>}]} {
    %c0 = arith.constant 0 : index
    %c0_0 = arith.constant 0 : index
    %0 = vector.load %arg2[%c0, %c0_0] : memref<1x1024xf32, #tpu.memory_space<vmem>>, vector<1x1024xf32>
    %1 = vector.shape_cast %0 : vector<1x1024xf32> to vector<1x1024xf32>
    %2 = vector.broadcast %1 : vector<1x1024xf32> to vector<8x1024xf32>
    %c0_1 = arith.constant 0 : index
    %c0_2 = arith.constant 0 : index
    %3 = vector.load %arg3[%c0_1, %c0_2] : memref<8x1024xf32, #tpu.memory_space<vmem>>, vector<8x1024xf32>
    tpu.vector_store %arg3[%c0_1, %c0_2], %2 {strides = array<i32>} : memref<8x1024xf32, #tpu.memory_space<vmem>>, vector<8x1024xf32>,
    return
  }
  func.func @transform_0(%arg0: i32, %arg1: i32) -> (i32, i32) {
    %c0_i32 = arith.constant 0 : i32
    %c0_i32_0 = arith.constant 0 : i32
    return %c0_i32, %arg0 : i32, i32
  }
  func.func @transform_1(%arg0: i32, %arg1: i32) -> (i32, i32) {
    %c0_i32 = arith.constant 0 : i32
    return %arg1, %arg0 : i32, i32
  }
}

</mosaic_0001>

<llo_original>
// kernel: tpu_custom_call.1
$region0: #{tpu_custom_call.1}
  #allocation0 [shape = 'u32[]', space=smem, size = 0x4, offset = 0x4, fixed_abs, tag = 'smem constant byte address 0x4 - core index']
  #allocation1 [shape = 'u32[72,128]{1,0:T(1,128)}', space=vmem, size = 0x9000, scoped, tag = 'internal scratch']
  %s0 = inlined_call_operand.hbm [shape: f32[1,1024], index: 0, kind: input, shape index: {}]
  %s1 = inlined_call_operand.hbm [shape: f32[8,1024], index: 1, kind: output, shape index: {}]
  %s2 = sld [smem:[#allocation0]]
  $region18: #{tpu_custom_call.1} parent=0
    _
  %s4 = ssub.s32 1, %s2
  %s5 = scalar_select 0, %s4, %s2
  $region1: #{tpu_custom_call.1} parent=0
    #allocation2 [shape = 'u8[4096]{0}', space=vmem, size = 0x1000, scoped, tag = 'input window, operand 0, single buffered']
    #allocation3 [shape = 's32[1]{0}', space=sflag, size = 0x4, scoped, tag = 'scoped memory for tpu_custom_call.1']
    #allocation4 [shape = 's32[1]{0}', space=sflag, size = 0x4, scoped, tag = 'scoped memory for tpu_custom_call.1']
    #allocation5 [shape = 'u8[32768]{0}', space=vmem, size = 0x8000, scoped, tag = 'output window, operand 0, single buffered']
    %6 = vsyncpa [#allocation3], 0
    %7 = vsyncpa [#allocation4], 0
    // Predicated region
    $region2: #{tpu_custom_call.1} parent=1 // pred_check
      _
    $region3: #{tpu_custom_call.1} parent=1 // pred_check_branch
      %9 = sbr.rel (0) target = $region5
    $region4: #{tpu_custom_call.1} parent=1 // pred_region
      %11 = vsyncadd [#allocation3], 0
      %s13 = sshll.u32 %s0, 4
      %s14 = int_to_ptr.hbm [resolvable:$true] %s13
      %s15 = sshll.u32 [#allocation2], 4
      %s16 = int_to_ptr.vmem [resolvable:$true] %s15
      %18 = dma.hbm_to_vmem [thread:$0]  %s14, 128, %s16, [#allocation3]
    $region5: #{tpu_custom_call.1} parent=1 // pred_fallthru
      _
    // Predicated region
    $region6: #{tpu_custom_call.1} parent=1 // pred_check
      _
    $region7: #{tpu_custom_call.1} parent=1 // pred_check_branch
      %20 = sbr.rel (0) target = $region9
    $region8: #{tpu_custom_call.1} parent=1 // pred_region
      %22 = dma.done [#allocation3], 128
    $region9: #{tpu_custom_call.1} parent=1 // pred_fallthru
      _
    %v23 = vld [vmem:[#allocation2] sm:$0xff]
    %v25 = vperm.slane %v23, 0
    %v26 = vperm.slane %v23, 1
    %v27 = vperm.slane %v23, 2
    %v28 = vperm.slane %v23, 3
    %v29 = vperm.slane %v23, 4
    %v30 = vperm.slane %v23, 5
    %v31 = vperm.slane %v23, 6
    %v32 = vperm.slane %v23, 7
    %41 = vst [vmem:[#allocation5] sm:$0xff] %v25
    %42 = vst [vmem:[#allocation5 + $0x8] sm:$0xff] %v26
    %43 = vst [vmem:[#allocation5 + $0x10] sm:$0xff] %v27
    %44 = vst [vmem:[#allocation5 + $0x18] sm:$0xff] %v28
    %45 = vst [vmem:[#allocation5 + $0x20] sm:$0xff] %v29
    %46 = vst [vmem:[#allocation5 + $0x28] sm:$0xff] %v30
    %47 = vst [vmem:[#allocation5 + $0x30] sm:$0xff] %v31
    %48 = vst [vmem:[#allocation5 + $0x38] sm:$0xff] %v32
    // Predicated region
    $region10: #{tpu_custom_call.1} parent=1 // pred_check
      _
    $region11: #{tpu_custom_call.1} parent=1 // pred_check_branch
      %50 = sbr.rel (0) target = $region13
    $region12: #{tpu_custom_call.1} parent=1 // pred_region
      %52 = vsyncadd [#allocation4], 0
      %s54 = sshll.u32 [#allocation5], 4
      %s55 = int_to_ptr.vmem [resolvable:$true] %s54
      %s56 = sshll.u32 %s1, 4
      %s57 = int_to_ptr.hbm [resolvable:$true] %s56
      %59 = dma.vmem_to_hbm [thread:$0]  %s55, 1024, %s57, [#allocation4]
    $region13: #{tpu_custom_call.1} parent=1 // pred_fallthru
      _
    // Predicated region
    $region14: #{tpu_custom_call.1} parent=1 // pred_check
      _
    $region15: #{tpu_custom_call.1} parent=1 // pred_check_branch
      %61 = sbr.rel (0) target = $region17
    $region16: #{tpu_custom_call.1} parent=1 // pred_region
      %63 = dma.done [#allocation4], 1024
    $region17: #{tpu_custom_call.1} parent=1 // pred_fallthru
      _
    %64 = vsyncpa [#allocation3], 1
    %65 = vsyncpa [#allocation4], 1

</llo_original>
